<compile_context>
chip_gen: v6e
topology: v6e:2x2x1
jax: 0.10.0
libtpu: 0.0.40
codegen_flags: <defaults>
</compile_context>

<pallas_src>
import functools
import math

import jax
import jax.numpy as jnp
from jax.experimental import pallas as pl
from jax.experimental.pallas import tpu as pltpu

EPS = 1e-6      # FuncToNodeSum degree epsilon
LN_EPS = 1e-5   # LayerNorm epsilon (torch default)


def _round_up(x, m):
    return (x + m - 1) // m * m


def _elementwise_dtype():
    # bf16 VALU exists on v6e / v7x; keep f32 on v5e and older (no bf16 VPU).
    try:
        kind = jax.devices()[0].device_kind.lower()
    except Exception:
        return jnp.float32
    return jnp.bfloat16 if ("v6" in kind or "v7" in kind) else jnp.float32


def _num_tensorcores():
    # TensorCores visible to one pallas_call grid (v7x parts have 2 TCs/chip).
    try:
        kind = jax.devices()[0].device_kind.lower()
    except Exception:
        return 1
    return 2 if "v7" in kind else 1


# ----------------------------------------------------------------------------
# Pallas kernel: per-candidate rule aggregation + MLP scoring (+ mask + bias)
# ----------------------------------------------------------------------------
def _rule_score_kernel(rc_ref, wf_ref, ln_g_ref, ln_b_ref, w1a_ref, w2_ref,
                       b2_ref, bias_ref, out_ref, *, h_dtype):
    rc = rc_ref[...]                                              # [R, TN] f32
    tn = rc.shape[1]

    # Grounding degree (and scatter mask) from an exact f32 sublane reduce on
    # the XLU; no ones row in the weight matrix, so msg rows stay tile-aligned.
    cnt = jnp.sum(rc, axis=0, keepdims=True)                      # [1, TN]

    # Weighted rule -> candidate aggregation on the MXU (K = R is tiny).
    msg = jnp.dot(wf_ref[...], rc,
                  preferred_element_type=jnp.float32)             # [D, TN]

    # Degree normalization: one EUP reciprocal (free slot) + D VPU multiplies.
    # The uniform per-column scale error of approx=True cancels in the LN.
    inv = pl.reciprocal(cnt + EPS, approx=True)
    x = msg * inv

    # LayerNorm over mlp_rule_dim (sublane axis) + ReLU, all f32.
    mu = jnp.mean(x, axis=0, keepdims=True)
    var = jnp.mean(jnp.square(x - mu), axis=0, keepdims=True)
    x = (x - mu) * jax.lax.rsqrt(var + LN_EPS)
    x = x * ln_g_ref[...] + ln_b_ref[...]                         # [D,1] bcast
    x = jnp.maximum(x, 0.0)

    # score_model = MLP(D, [128, 1]).  b1 is folded into w1 via a ones row on
    # x; the final 1xH1 projection runs on the idle MXU (result lane-dense).
    xa = jnp.concatenate([x, jnp.ones((1, tn), x.dtype)], axis=0)   # [D+1, TN]
    h = jnp.dot(w1a_ref[...], xa,
                preferred_element_type=jnp.float32)                 # [H1, TN]
    h = jnp.maximum(h.astype(h_dtype), 0.0)    # bf16 on v6e/v7x, f32 on v5e
    score = jnp.dot(w2_ref[...], h,
                    preferred_element_type=jnp.float32)             # [1, TN]

    # Fused scatter mask (only grounded candidates keep a score) + entity bias.
    out_ref[...] = jnp.where(cnt > 0.0, score + b2_ref[...], 0.0) + bias_ref[...]


def rule_score_pallas(rule_count, wf_t, ln_g, ln_b, w1a, w2, b2, bias, *,
                      tile_target=4096):
    """rule_count: [R, B, E] f32 grounding counts (native layout, streamed f32,
    no host cast pass).  wf_t: [D, R] confidence-weighted mlp_feature^T.
    w1a: [H1, D+1] first MLP layer with its bias folded as the last column.
    w2: [1, H1].  b2: [1, 1].  bias: [E] per-entity bias.
    Returns [B, E] masked + biased scores."""
    R, B, E = rule_count.shape
    D = wf_t.shape[0]
    H1 = w1a.shape[0]

    # ---- entity-axis lane alignment ----------------------------------------
    E_pad = _round_up(E, 128)
    if E_pad != E:
        # TODO(synk): one extra pad pass over the largest array when
        # num_entities is not a multiple of 128; have the grounding producer
        # emit entity-padded counts to avoid it.
        rule_count = jnp.pad(rule_count, ((0, 0), (0, 0), (0, E_pad - E)))
        bias = jnp.pad(bias, (0, E_pad - E))
    rc = rule_count.reshape(R, B * E_pad)        # contiguous reshape, no copy
    N_pad = B * E_pad

    # ---- tile selection ------------------------------------------------------
    # Either tile_n is a multiple of E_pad (covers whole batch rows; bias kept
    # resident) or a divisor of E_pad (bias streamed via a modular index map).
    h_dtype = _elementwise_dtype()
    h_bytes = 2 if h_dtype == jnp.bfloat16 else 4
    tile_target = max(128, _round_up(tile_target, 128))

    if E_pad <= tile_target:
        m_max = min(B, max(1, tile_target // E_pad))
        cands = [m * E_pad for m in range(1, m_max + 1) if B % m == 0]
    else:
        q = E_pad // 128
        cands = [128 * d for d in range(1, q + 1)
                 if q % d == 0 and 128 * d <= tile_target]
    cands = sorted(set(cands))

    def vmem_est(tn):
        return (2 * R * tn * 4                          # double-buffered rc
                + 2 * tn * 4                            # double-buffered out
                + 2 * max(tn, E_pad) * 4                # bias
                + (D * R + H1 * (D + 1) + H1 + 2 * D + 2) * 4   # resident params
                + tn * (2 * D + 6) * 4                  # msg/x/xa/cnt/score
                + tn * H1 * (4 + h_bytes))              # h (f32 MXU out + cast)

    budget = 48 * 2 ** 20                 # safe on v7x's 64 MiB/TC
    fitting = [c for c in cands if 2 * vmem_est(c) + (2 << 20) <= budget]
    tile_n = (fitting or cands)[-1]

    # Multi-TC parts: prefer >= 2 grid steps per core when a smaller tile with
    # the same divisibility exists (single-core parts keep the biggest tile).
    n_cores = _num_tensorcores()
    if n_cores > 1:
        while (N_pad // tile_n) < 2 * n_cores:
            smaller = [c for c in cands if c < tile_n]
            if not smaller:
                break
            tile_n = smaller[-1]

    grid = (N_pad // tile_n,)

    # ---- bias handling: never materialize jnp.tile(bias, batch) over N ------
    if tile_n >= E_pad:
        m = tile_n // E_pad
        bias_arr = jnp.tile(bias.reshape(1, E_pad), (1, m))   # tiny: tile_n f32
        bias_spec = pl.BlockSpec((1, tile_n), lambda i: (0, 0))       # resident
    else:
        nblk = E_pad // tile_n
        bias_arr = bias.reshape(1, E_pad)
        bias_spec = pl.BlockSpec((1, tile_n), lambda i: (0, i % nblk))

    # ---- honest VMEM budget (real need + ~2x headroom, never below default) -
    vmem_limit = int(min(56 * 2 ** 20,
                         max(32 * 2 ** 20, 2 * vmem_est(tile_n) + (2 << 20))))

    out = pl.pallas_call(
        functools.partial(_rule_score_kernel, h_dtype=h_dtype),
        out_shape=jax.ShapeDtypeStruct((1, N_pad), jnp.float32),
        grid_spec=pltpu.PrefetchScalarGridSpec(
            num_scalar_prefetch=0,
            grid=grid,
            in_specs=[
                # rc is the only large streamed operand; every other operand is
                # grid-invariant and stays resident in VMEM.
                pl.BlockSpec((R, tile_n), lambda i: (0, i)),     # rule counts
                pl.BlockSpec((D, R), lambda i: (0, 0)),          # weighted feat^T
                pl.BlockSpec((D, 1), lambda i: (0, 0)),          # LN gamma
                pl.BlockSpec((D, 1), lambda i: (0, 0)),          # LN beta
                pl.BlockSpec((H1, D + 1), lambda i: (0, 0)),     # MLP [W1 | b1]
                pl.BlockSpec((1, H1), lambda i: (0, 0)),         # MLP w2 (row)
                pl.BlockSpec((1, 1), lambda i: (0, 0)),          # MLP b2
                bias_spec,                                       # entity bias
            ],
            out_specs=pl.BlockSpec((1, tile_n), lambda i: (0, i)),  # lane-dense
        ),
        compiler_params=pltpu.CompilerParams(
            dimension_semantics=("parallel",),
            vmem_limit_bytes=vmem_limit),
    )(rc, wf_t.astype(jnp.float32), ln_g, ln_b, w1a,
      w2.astype(h_dtype), b2, bias_arr)
    return out.reshape(B, E_pad)[:, :E]


# ----------------------------------------------------------------------------
# Plain-JAX glue: parameter init, add_ruleE_g precompute, forward wrapper
# ----------------------------------------------------------------------------
def _uniform(key, shape, bound):
    return jax.random.uniform(key, shape, jnp.float32, -bound, bound)


def init_params(key, *, num_entities, num_relations, hidden_dim,
                mlp_rule_dim, num_rules, gamma_fact, gamma_rule):
    epsilon = 2.0
    rng_fact = (gamma_fact + epsilon) / hidden_dim
    ks = jax.random.split(key, 8)
    params = dict(
        gamma_fact=jnp.float32(gamma_fact),
        gamma_rule=jnp.float32(gamma_rule),
        embedding_range_fact=jnp.float32(rng_fact),
        bias=jnp.zeros((num_entities,), jnp.float32),
        entity_embedding=_uniform(ks[0], (num_entities, hidden_dim * 2), rng_fact),
        relation_embedding=_uniform(ks[1], (num_relations + 1, hidden_dim), rng_fact),
        # kaiming_uniform(a=sqrt(5), fan_in) -> bound = 1/sqrt(fan_in)
        mlp_feature=_uniform(ks[2], (num_rules, mlp_rule_dim),
                             1.0 / math.sqrt(mlp_rule_dim)),
        rule_emb=_uniform(ks[3], (num_rules, hidden_dim),
                          1.0 / math.sqrt(hidden_dim)),
        # FuncToNodeSum LayerNorm, stored feature-major ([D, 1]) for the kernel
        ln_gamma=jnp.ones((mlp_rule_dim, 1), jnp.float32),
        ln_beta=jnp.zeros((mlp_rule_dim, 1), jnp.float32),
        # score_model = MLP(mlp_rule_dim, [128, 1]) (Linear default init),
        # weights stored to match the kernel layout: W1 [out,in], b1 [out,1],
        # w2 as a row vector [1, out_prev] for the MXU projection.
        w1=_uniform(ks[4], (128, mlp_rule_dim), 1.0 / math.sqrt(mlp_rule_dim)),
        b1=_uniform(ks[5], (128, 1), 1.0 / math.sqrt(mlp_rule_dim)),
        w2=_uniform(ks[6], (1, 128), 1.0 / math.sqrt(128.0)),
        b2=_uniform(ks[7], (1, 1), 1.0 / math.sqrt(128.0)),
    )
    return params


def add_ruleE_g(params, rule_features, rule_masks, *,
                num_relations, padding_index, hidden_dim, p):
    """Reproduces RulE.add_ruleE_g (rule-weight embedding precompute)."""
    rel_emb = params["relation_embedding"]
    inputs = rule_features[:, 2:]                                       # [NR, L]
    flag = jnp.where((inputs // num_relations) % 2 == 0, 1.0, -1.0)[..., None]
    inputs_com = inputs % num_relations
    inputs_com = jnp.where(inputs == num_relations * 2, padding_index, inputs_com)
    embedding = rel_emb[inputs_com] * flag                              # [NR, L, H]
    rule_embedding = params["rule_emb"][rule_features[:, 0]]            # [NR, H]
    emb_r = rel_emb[rule_features[:, 1] % num_relations]
    flag_r = jnp.where((rule_features[:, 1] // num_relations) % 2 == 0,
                       1.0, -1.0)[..., None]
    emb_r = emb_r * flag_r
    rule_body = embedding * rule_masks[..., None].astype(jnp.float32)
    outputs = rule_body.sum(-2) + rule_embedding
    dist = params["gamma_rule"] / hidden_dim - jnp.power(outputs - emb_r, p)
    return dist                                                         # [NR, H]


def rule_forward(params, rules_weight_emb, rule_count, rule_index,
                 *, batch_size, num_entities):
    """RulE.forward() after grounding.

    rule_count : [R_active, B, E] grounding counts (graph.grounding output)
    rule_index : [R_active] int indices of active rules for the query relation
    """
    # TODO(synk): graph.grounding() walks an external KG structure and the
    # host-side "all counts == 0" early-return branch are not kernelizable;
    # grounding counts are provided as an input here.
    # TODO(synk): FuncToNodeSum's source is not in the provided module; we use
    # a degree-normalized, rule-confidence-weighted sum + LayerNorm + ReLU
    # (rule confidence = sigmoid of summed rules_weight_emb dims).
    w = jax.nn.sigmoid(rules_weight_emb[rule_index].sum(-1))            # [R]
    wf_t = (w[:, None] * params["mlp_feature"][rule_index]).T           # [D, R]
    # Fold b1 into w1 (the kernel appends a ones row to its features).
    w1a = jnp.concatenate([params["w1"], params["b1"]], axis=1)         # [H1, D+1]

    score = rule_score_pallas(
        rule_count.astype(jnp.float32), wf_t,
        params["ln_gamma"], params["ln_beta"],
        w1a, params["w2"], params["b2"], params["bias"])                # [B, E]

    mask = jnp.ones((batch_size, num_entities), dtype=bool)
    return score, mask


# ----------------------------------------------------------------------------
if __name__ == "__main__":
    key = jax.random.PRNGKey(0)

    # small synthetic config
    num_entities = 128
    num_relations = 8
    padding_index = num_relations
    hidden_dim = 32
    mlp_rule_dim = 16
    num_rules = 8
    max_body_len = 3
    p_norm = 2
    gamma_fact, gamma_rule = 6.0, 2.0
    batch_size = 2
    query_r = 3

    k_par, k_body, k_len, k_cnt = jax.random.split(key, 4)
    params = init_params(k_par,
                         num_entities=num_entities, num_relations=num_relations,
                         hidden_dim=hidden_dim, mlp_rule_dim=mlp_rule_dim,
                         num_rules=num_rules, gamma_fact=gamma_fact,
                         gamma_rule=gamma_rule)

    # rule_features: [num_rules, 2 + max_body_len] = [rule_id, head_rel, body...]
    body = jax.random.randint(k_body, (num_rules, max_body_len),
                              0, 2 * num_relations)
    lens = jax.random.randint(k_len, (num_rules,), 1, max_body_len + 1)
    pos = jnp.arange(max_body_len)[None, :]
    rule_masks = pos < lens[:, None]                                  # bool [NR, L]
    body = jnp.where(rule_masks, body, padding_index)
    rule_features = jnp.concatenate(
        [jnp.arange(num_rules)[:, None],
         jnp.full((num_rules, 1), query_r),
         body], axis=1).astype(jnp.int32)

    # eval_compute_rule_weight equivalent (rules_weight_emb precompute)
    rules_weight_emb = add_ruleE_g(params, rule_features, rule_masks,
                                   num_relations=num_relations,
                                   padding_index=padding_index,
                                   hidden_dim=hidden_dim, p=p_norm)

    # synthetic grounding counts for the active rules of query_r
    rule_index = jnp.arange(num_rules, dtype=jnp.int32)
    rule_count = jax.random.randint(
        k_cnt, (num_rules, batch_size, num_entities), 0, 3).astype(jnp.float32)

    score, mask = rule_forward(params, rules_weight_emb, rule_count, rule_index,
                               batch_size=batch_size, num_entities=num_entities)
    jax.block_until_ready(score)
    assert score.shape == (batch_size, num_entities)
    assert mask.shape == (batch_size, num_entities)
    print("KERNEL_OK")
</pallas_src>

<mosaic_0001>
module attributes {stable_mosaic.version = 11 : i64} {
  func.func @_rule_score_kernel(%arg0: i32, %arg1: memref<8x256xf32, #tpu.memory_space<vmem>>, %arg2: memref<16x8xf32, #tpu.memory_space<vmem>>, %arg3: memref<16x1xf32, #tpu.memory_space<vmem>>, %arg4: memref<16x1xf32, #tpu.memory_space<vmem>>, %arg5: memref<128x17xf32, #tpu.memory_space<vmem>>, %arg6: memref<1x128xf32, #tpu.memory_space<vmem>>, %arg7: memref<1x1xf32, #tpu.memory_space<vmem>>, %arg8: memref<1x256xf32, #tpu.memory_space<vmem>>, %arg9: memref<1x256xf32, #tpu.memory_space<vmem>>) attributes {dimension_semantics = [#tpu.dimension_semantics<parallel>], iteration_bounds = array<i64: 1>, scalar_prefetch = 0 : i64, scratch_operands = 0 : i64, tpu.core_type = #tpu.core_type<tc>, window_params = [{transform_indices = @transform_0, window_bounds = array<i64: 8, 256>}, {pipeline_mode = #tpu.pipeline_mode<synchronous>, transform_indices = @transform_1, window_bounds = array<i64: 16, 8>}, {pipeline_mode = #tpu.pipeline_mode<synchronous>, transform_indices = @transform_2, window_bounds = array<i64: 16, 1>}, {pipeline_mode = #tpu.pipeline_mode<synchronous>, transform_indices = @transform_3, window_bounds = array<i64: 16, 1>}, {pipeline_mode = #tpu.pipeline_mode<synchronous>, transform_indices = @transform_4, window_bounds = array<i64: 128, 17>}, {pipeline_mode = #tpu.pipeline_mode<synchronous>, transform_indices = @transform_5, window_bounds = array<i64: 1, 128>}, {pipeline_mode = #tpu.pipeline_mode<synchronous>, transform_indices = @transform_6, window_bounds = array<i64: 1, 1>}, {pipeline_mode = #tpu.pipeline_mode<synchronous>, transform_indices = @transform_7, window_bounds = array<i64: 1, 256>}, {transform_indices = @transform_8, window_bounds = array<i64: 1, 256>}]} {
    %c0 = arith.constant 0 : index
    %c0_0 = arith.constant 0 : index
    %0 = vector.load %arg1[%c0, %c0_0] : memref<8x256xf32, #tpu.memory_space<vmem>>, vector<8x256xf32>
    %cst = arith.constant dense<0.000000e+00> : vector<256xf32>
    %1 = vector.multi_reduction <add>, %0, %cst [0] : vector<8x256xf32> to vector<256xf32>
    %2 = vector.shape_cast %1 : vector<256xf32> to vector<1x256xf32>
    %c0_1 = arith.constant 0 : index
    %c0_2 = arith.constant 0 : index
    %3 = vector.load %arg2[%c0_1, %c0_2] : memref<16x8xf32, #tpu.memory_space<vmem>>, vector<16x8xf32>
    %cst_3 = arith.constant dense<0.000000e+00> : vector<16x256xf32>
    %4 = tpu.matmul %3, %0, %cst_3 {dimension_numbers = #tpu.dot_dimension_numbers<[1], [0], [0], [1], [0, 0, 1, 1], [], []>} : vector<16x8xf32>, vector<8x256xf32>, vector<16x256xf32> -> vector<16x256xf32>
    %cst_4 = arith.constant 9.99999997E-7 : f32
    %5 = vector.broadcast %cst_4 : f32 to vector<1x256xf32>
    %6 = arith.addf %2, %5 : vector<1x256xf32>
    %7 = tpu.reciprocal %6 {approx = true} : vector<1x256xf32> -> vector<1x256xf32>
    %8 = vector.broadcast %7 : vector<1x256xf32> to vector<16x256xf32>
    %9 = arith.mulf %4, %8 : vector<16x256xf32>
    %cst_5 = arith.constant dense<0.000000e+00> : vector<256xf32>
    %10 = vector.multi_reduction <add>, %9, %cst_5 [0] : vector<16x256xf32> to vector<256xf32>
    %11 = vector.shape_cast %10 : vector<256xf32> to vector<1x256xf32>
    %cst_6 = arith.constant 1.600000e+01 : f32
    %12 = vector.broadcast %cst_6 : f32 to vector<1x256xf32>
    %13 = arith.divf %11, %12 : vector<1x256xf32>
    %14 = vector.broadcast %13 : vector<1x256xf32> to vector<16x256xf32>
    %15 = arith.subf %9, %14 : vector<16x256xf32>
    %16 = arith.mulf %15, %15 : vector<16x256xf32>
    %cst_7 = arith.constant dense<0.000000e+00> : vector<256xf32>
    %17 = vector.multi_reduction <add>, %16, %cst_7 [0] : vector<16x256xf32> to vector<256xf32>
    %18 = vector.shape_cast %17 : vector<256xf32> to vector<1x256xf32>
    %cst_8 = arith.constant 1.600000e+01 : f32
    %19 = vector.broadcast %cst_8 : f32 to vector<1x256xf32>
    %20 = arith.divf %18, %19 : vector<1x256xf32>
    %21 = vector.broadcast %13 : vector<1x256xf32> to vector<16x256xf32>
    %22 = arith.subf %9, %21 : vector<16x256xf32>
    %cst_9 = arith.constant 9.99999974E-6 : f32
    %23 = vector.broadcast %cst_9 : f32 to vector<1x256xf32>
    %24 = arith.addf %20, %23 : vector<1x256xf32>
    %25 = math.rsqrt %24 : vector<1x256xf32>
    %26 = vector.broadcast %25 : vector<1x256xf32> to vector<16x256xf32>
    %27 = arith.mulf %22, %26 : vector<16x256xf32>
    %c0_10 = arith.constant 0 : index
    %c0_11 = arith.constant 0 : index
    %28 = vector.load %arg3[%c0_10, %c0_11] : memref<16x1xf32, #tpu.memory_space<vmem>>, vector<16x1xf32>
    %29 = vector.broadcast %28 : vector<16x1xf32> to vector<16x256xf32>
    %30 = arith.mulf %27, %29 : vector<16x256xf32>
    %c0_12 = arith.constant 0 : index
    %c0_13 = arith.constant 0 : index
    %31 = vector.load %arg4[%c0_12, %c0_13] : memref<16x1xf32, #tpu.memory_space<vmem>>, vector<16x1xf32>
    %32 = vector.broadcast %31 : vector<16x1xf32> to vector<16x256xf32>
    %33 = arith.addf %30, %32 : vector<16x256xf32>
    %cst_14 = arith.constant 0.000000e+00 : f32
    %34 = vector.broadcast %cst_14 : f32 to vector<16x256xf32>
    %35 = arith.maximumf %33, %34 : vector<16x256xf32>
    %cst_15 = arith.constant 1.000000e+00 : f32
    %36 = vector.broadcast %cst_15 : f32 to vector<1x256xf32>
    %37 = tpu.concatenate %35, %36 in 0 : vector<16x256xf32>, vector<1x256xf32> -> vector<17x256xf32>
    %c0_16 = arith.constant 0 : index
    %c0_17 = arith.constant 0 : index
    %38 = vector.load %arg5[%c0_16, %c0_17] : memref<128x17xf32, #tpu.memory_space<vmem>>, vector<128x17xf32>
    %cst_18 = arith.constant dense<0.000000e+00> : vector<128x256xf32>
    %39 = tpu.matmul %38, %37, %cst_18 {dimension_numbers = #tpu.dot_dimension_numbers<[1], [0], [0], [1], [0, 0, 1, 1], [], []>} : vector<128x17xf32>, vector<17x256xf32>, vector<128x256xf32> -> vector<128x256xf32>
    %cst_19 = arith.constant 0.000000e+00 : f32
    %40 = vector.broadcast %cst_19 : f32 to vector<128x256xf32>
    %41 = arith.maximumf %39, %40 : vector<128x256xf32>
    %c0_20 = arith.constant 0 : index
    %c0_21 = arith.constant 0 : index
    %42 = vector.load %arg6[%c0_20, %c0_21] : memref<1x128xf32, #tpu.memory_space<vmem>>, vector<1x128xf32>
    %cst_22 = arith.constant dense<0.000000e+00> : vector<1x256xf32>
    %43 = tpu.matmul %42, %41, %cst_22 {dimension_numbers = #tpu.dot_dimension_numbers<[1], [0], [0], [1], [0, 0, 1, 1], [], []>} : vector<1x128xf32>, vector<128x256xf32>, vector<1x256xf32> -> vector<1x256xf32>
    %cst_23 = arith.constant 0.000000e+00 : f32
    %44 = vector.broadcast %cst_23 : f32 to vector<1x256xf32>
    %45 = arith.cmpf ogt, %2, %44 : vector<1x256xf32>
    %c0_24 = arith.constant 0 : index
    %c0_25 = arith.constant 0 : index
    %46 = vector.load %arg7[%c0_24, %c0_25] : memref<1x1xf32, #tpu.memory_space<vmem>>, vector<1x1xf32>
    %47 = vector.broadcast %46 : vector<1x1xf32> to vector<1x256xf32>
    %48 = arith.addf %43, %47 : vector<1x256xf32>
    %cst_26 = arith.constant 0.000000e+00 : f32
    %49 = vector.broadcast %cst_26 : f32 to vector<1x256xf32>
    %50 = arith.select %45, %48, %49 : vector<1x256xi1>, vector<1x256xf32>
    %c0_27 = arith.constant 0 : index
    %c0_28 = arith.constant 0 : index
    %51 = vector.load %arg8[%c0_27, %c0_28] : memref<1x256xf32, #tpu.memory_space<vmem>>, vector<1x256xf32>
    %52 = arith.addf %50, %51 : vector<1x256xf32>
    %c0_29 = arith.constant 0 : index
    %c0_30 = arith.constant 0 : index
    %53 = vector.load %arg9[%c0_29, %c0_30] : memref<1x256xf32, #tpu.memory_space<vmem>>, vector<1x256xf32>
    tpu.vector_store %arg9[%c0_29, %c0_30], %52 {strides = array<i32>} : memref<1x256xf32, #tpu.memory_space<vmem>>, vector<1x256xf32>,
    return
  }
  func.func @transform_0(%arg0: i32) -> (i32, i32) {
    %c0_i32 = arith.constant 0 : i32
    %c0_i32_0 = arith.constant 0 : i32
    return %c0_i32, %arg0 : i32, i32
  }
  func.func @transform_1(%arg0: i32) -> (i32, i32) {
    %c0_i32 = arith.constant 0 : i32
    %c0_i32_0 = arith.constant 0 : i32
    %c0_i32_1 = arith.constant 0 : i32
    return %c0_i32, %c0_i32_0 : i32, i32
  }
  func.func @transform_2(%arg0: i32) -> (i32, i32) {
    %c0_i32 = arith.constant 0 : i32
    %c0_i32_0 = arith.constant 0 : i32
    %c0_i32_1 = arith.constant 0 : i32
    return %c0_i32, %c0_i32_0 : i32, i32
  }
  func.func @transform_3(%arg0: i32) -> (i32, i32) {
    %c0_i32 = arith.constant 0 : i32
    %c0_i32_0 = arith.constant 0 : i32
    %c0_i32_1 = arith.constant 0 : i32
    return %c0_i32, %c0_i32_0 : i32, i32
  }
  func.func @transform_4(%arg0: i32) -> (i32, i32) {
    %c0_i32 = arith.constant 0 : i32
    %c0_i32_0 = arith.constant 0 : i32
    %c0_i32_1 = arith.constant 0 : i32
    return %c0_i32, %c0_i32_0 : i32, i32
  }
  func.func @transform_5(%arg0: i32) -> (i32, i32) {
    %c0_i32 = arith.constant 0 : i32
    %c0_i32_0 = arith.constant 0 : i32
    %c0_i32_1 = arith.constant 0 : i32
    return %c0_i32, %c0_i32_0 : i32, i32
  }
  func.func @transform_6(%arg0: i32) -> (i32, i32) {
    %c0_i32 = arith.constant 0 : i32
    %c0_i32_0 = arith.constant 0 : i32
    %c0_i32_1 = arith.constant 0 : i32
    return %c0_i32, %c0_i32_0 : i32, i32
  }
  func.func @transform_7(%arg0: i32) -> (i32, i32) {
    %c0_i32 = arith.constant 0 : i32
    %c0_i32_0 = arith.constant 0 : i32
    %c0_i32_1 = arith.constant 0 : i32
    return %c0_i32, %c0_i32_0 : i32, i32
  }
  func.func @transform_8(%arg0: i32) -> (i32, i32) {
    %c0_i32 = arith.constant 0 : i32
    %c0_i32_0 = arith.constant 0 : i32
    return %c0_i32, %arg0 : i32, i32
  }
}

</mosaic_0001>

<llo_original>
// kernel: tpu_custom_call.1
$region0: #{tpu_custom_call.1}
  #allocation0 [shape = 'u32[]', space=smem, size = 0x4, offset = 0x4, fixed_abs, tag = 'smem constant byte address 0x4 - core index']
  #allocation1 [shape = 'u32[144,128]{1,0:T(1,128)}', space=vmem, size = 0x12000, scoped, tag = 'internal scratch']
  #allocation2 [shape = 'f32[1,1]{1,0:T(1,128)S(1)}', space=vmem, size = 0x200, scoped, tag = 'scoped memory for tpu_custom_call.1']
  %s0 = inlined_call_operand.vmem [shape: f32[8,256], index: 0, kind: input, shape index: {}]
  %s1 = inlined_call_operand.vmem [shape: f32[16,8], index: 1, kind: input, shape index: {}]
  %s2 = inlined_call_operand.vmem [shape: f32[16,1], index: 2, kind: input, shape index: {}]
  %s3 = inlined_call_operand.vmem [shape: f32[16,1], index: 3, kind: input, shape index: {}]
  %s4 = inlined_call_operand.vmem [shape: f32[128,17], index: 4, kind: input, shape index: {}]
  %s5 = inlined_call_operand.vmem [shape: f32[1,128], index: 5, kind: input, shape index: {}]
  %s6 = inlined_call_operand.<no memory space> [shape: f32[1,1], index: 6, kind: input, shape index: {}]
  %s7 = inlined_call_operand.vmem [shape: f32[1,256], index: 7, kind: input, shape index: {}]
  %s8 = inlined_call_operand.hbm [shape: f32[1,256], index: 8, kind: output, shape index: {}]
  %s9 = sld [smem:[#allocation0]]
  $region42: #{tpu_custom_call.1} parent=0
    _
  %s11 = ssub.s32 1, %s9
  %s12 = scalar_select 0, %s11, %s9
  %v13 = vstv %s6
  %14 = vst [vmem:[#allocation2] sm:$0x1] %v13
  $region1: #{tpu_custom_call.1} parent=0
    #allocation3 [shape = 'u8[1024]{0}', space=vmem, size = 0x400, scoped, tag = 'output window, operand 0, single buffered']
    #allocation4 [shape = 's32[1]{0}', space=sflag, size = 0x4, scoped, tag = 'scoped memory for tpu_custom_call.1']
    %15 = vsyncpa [#allocation4], 0
    // Predicated region
    $region2: #{tpu_custom_call.1} parent=1 // pred_check
      _
    $region3: #{tpu_custom_call.1} parent=1 // pred_check_branch
      %17 = sbr.rel (0) target = $region5
    $region4: #{tpu_custom_call.1} parent=1 // pred_region
      _
    $region5: #{tpu_custom_call.1} parent=1 // pred_fallthru
      _
    // Predicated region
    $region6: #{tpu_custom_call.1} parent=1 // pred_check
      _
    $region7: #{tpu_custom_call.1} parent=1 // pred_check_branch
      %19 = sbr.rel (0) target = $region9
    $region8: #{tpu_custom_call.1} parent=1 // pred_region
      _
    $region9: #{tpu_custom_call.1} parent=1 // pred_fallthru
      _
    // Predicated region
    $region10: #{tpu_custom_call.1} parent=1 // pred_check
      _
    $region11: #{tpu_custom_call.1} parent=1 // pred_check_branch
      %21 = sbr.rel (0) target = $region13
    $region12: #{tpu_custom_call.1} parent=1 // pred_region
      _
    $region13: #{tpu_custom_call.1} parent=1 // pred_fallthru
      _
    // Predicated region
    $region14: #{tpu_custom_call.1} parent=1 // pred_check
      _
    $region15: #{tpu_custom_call.1} parent=1 // pred_check_branch
      %23 = sbr.rel (0) target = $region17
    $region16: #{tpu_custom_call.1} parent=1 // pred_region
      _
    $region17: #{tpu_custom_call.1} parent=1 // pred_fallthru
      _
    // Predicated region
    $region18: #{tpu_custom_call.1} parent=1 // pred_check
      _
    $region19: #{tpu_custom_call.1} parent=1 // pred_check_branch
      %25 = sbr.rel (0) target = $region21
    $region20: #{tpu_custom_call.1} parent=1 // pred_region
      _
    $region21: #{tpu_custom_call.1} parent=1 // pred_fallthru
      _
    // Predicated region
    $region22: #{tpu_custom_call.1} parent=1 // pred_check
      _
    $region23: #{tpu_custom_call.1} parent=1 // pred_check_branch
      %27 = sbr.rel (0) target = $region25
    $region24: #{tpu_custom_call.1} parent=1 // pred_region
      _
    $region25: #{tpu_custom_call.1} parent=1 // pred_fallthru
      _
    // Predicated region
    $region26: #{tpu_custom_call.1} parent=1 // pred_check
      _
    $region27: #{tpu_custom_call.1} parent=1 // pred_check_branch
      %29 = sbr.rel (0) target = $region29
    $region28: #{tpu_custom_call.1} parent=1 // pred_region
      _
    $region29: #{tpu_custom_call.1} parent=1 // pred_fallthru
      _
    // Predicated region
    $region30: #{tpu_custom_call.1} parent=1 // pred_check
      _
    $region31: #{tpu_custom_call.1} parent=1 // pred_check_branch
      %31 = sbr.rel (0) target = $region33
    $region32: #{tpu_custom_call.1} parent=1 // pred_region
      _
    $region33: #{tpu_custom_call.1} parent=1 // pred_fallthru
      _
    %v32 = vld [vmem:[%s0] sm:$0xff]
    %v33 = vld [vmem:[%s0 + $0x8] sm:$0xff]
    %v34 = vrot.slane %v32, 4
    %v35 = vadd.f32 %v32, %v34
    %v36 = vrot.slane %v35, 2
    %v37 = vadd.f32 %v35, %v36
    %v38 = vrot.slane %v37, 1
    %v39 = vadd.f32 %v37, %v38
    %v40 = vrot.slane %v33, 4
    %v41 = vadd.f32 %v33, %v40
    %v42 = vrot.slane %v41, 2
    %v43 = vadd.f32 %v41, %v42
    %v44 = vrot.slane %v43, 1
    %v45 = vadd.f32 %v43, %v44
    %v46 = vld [vmem:[%s1] sm:$0xff]
    %v47 = vld [vmem:[%s1 + $0x8] sm:$0xff]
    %vm48 = vcmask 64512
    %v50 = vsel %vm48, %v46, 0
    %v53 = vsel %vm48, %v47, 0
    %55 = vmatprep.subr.mxu0 0.0
    %56 = vmatpush1.msra.mxu0 0.0
    %57 = vmatprep.subr.mxu0 0.0
    %58 = vmatpush1.msra.mxu0 0.0
    %59 = vmatprep.subr.mxu0 0.0
    %60 = vmatpush1.msra.mxu0 0.0
    %61 = vmatprep.subr.mxu0 0.0
    %62 = vmatpush1.msra.mxu0 0.0
    %63 = vmatprep.subr.mxu0 0.0
    %64 = vmatpush1.msra.mxu0 0.0
    %65 = vmatprep.subr.mxu0 0.0
    %66 = vmatpush1.msra.mxu0 0.0
    %67 = vmatprep.subr.mxu0 0.0
    %68 = vmatpush1.msra.mxu0 0.0
    %69 = vmatprep.subr.mxu0 0.0
    %70 = vmatpush1.msra.mxu0 0.0
    %71 = vmatprep.subr.mxu0 0.0
    %72 = vmatpush1.msra.mxu0 0.0
    %73 = vmatprep.subr.mxu0 0.0
    %74 = vmatpush1.msra.mxu0 0.0
    %75 = vmatprep.subr.mxu0 0.0
    %76 = vmatpush1.msra.mxu0 0.0
    %77 = vmatprep.subr.mxu0 0.0
    %78 = vmatpush1.msra.mxu0 0.0
    %79 = vmatprep.subr.mxu0 0.0
    %80 = vmatpush1.msra.mxu0 0.0
    %81 = vmatprep.subr.mxu0 0.0
    %82 = vmatpush1.msra.mxu0 0.0
    %83 = vmatprep.subr.mxu0 0.0
    %84 = vmatpush1.msra.mxu0 0.0
    %85 = vmatprep.subr.mxu0 %v33
    %86 = vmatpush1.msra.mxu0 %v32
    %87 = vmatprep.subr.mxu0 0.0
    %88 = vmatpush2.msra.mxu0 0.0
    %89 = vmatprep.subr.mxu0 0.0
    %90 = vmatpush2.msra.mxu0 0.0
    %91 = vmatprep.subr.mxu0 0.0
    %92 = vmatpush2.msra.mxu0 0.0
    %93 = vmatprep.subr.mxu0 0.0
    %94 = vmatpush2.msra.mxu0 0.0
    %95 = vmatprep.subr.mxu0 0.0
    %96 = vmatpush2.msra.mxu0 0.0
    %97 = vmatprep.subr.mxu0 0.0
    %98 = vmatpush2.msra.mxu0 0.0
    %99 = vmatprep.subr.mxu0 0.0
    %100 = vmatpush2.msra.mxu0 0.0
    %101 = vmatprep.subr.mxu0 0.0
    %102 = vmatpush2.msra.mxu0 0.0
    %103 = vmatprep.subr.mxu0 0.0
    %104 = vmatpush2.msra.mxu0 0.0
    %105 = vmatprep.subr.mxu0 0.0
    %106 = vmatpush2.msra.mxu0 0.0
    %107 = vmatprep.subr.mxu0 0.0
    %108 = vmatpush2.msra.mxu0 0.0
    %109 = vmatprep.subr.mxu0 0.0
    %110 = vmatpush2.msra.mxu0 0.0
    %111 = vmatprep.subr.mxu0 0.0
    %112 = vmatpush2.msra.mxu0 0.0
    %113 = vmatprep.subr.mxu0 0.0
    %114 = vmatpush2.msra.mxu0 0.0
    %115 = vmatprep.subr.mxu0 0.0
    %116 = vmatpush2.msra.mxu0 0.0
    %117 = vmatprep.subr.mxu0 0.0
    %118 = vmatpush2.msra.mxu0 0.0
    %119 = vmatprep.mubr.f32.mxu0 0.0
    %120 = vmatmul.mubr.f32.gmra.mxu0 %v50
    %v121 = vpop.f32.mrf.mxu0
    %v122 = vadd.f32 0.0, %v121
    %v123 = vpop.f32.mrf.mxu0
    %v124 = vadd.f32 0.0, %v123
    %125 = vmatprep.mubr.f32.mxu0 0.0
    %126 = vmatmul.mubr.f32.gmra.mxu0 %v53
    %v127 = vpop.f32.mrf.mxu0
    %v128 = vadd.f32 0.0, %v127
    %v129 = vpop.f32.mrf.mxu0
    %v130 = vadd.f32 0.0, %v129
    %131 = vdwg.mxu0
    %v132 = vadd.f32 %v39, 1e-06
    %v133 = vadd.f32 %v45, 1e-06
    %v134 = vrcp.pop %v132
    %v135 = vrcp.pop %v133
    %v136 = vmul.f32 %v122, %v134
    %v137 = vmul.f32 %v124, %v135
    %v138 = vmul.f32 %v128, %v134
    %v139 = vmul.f32 %v130, %v135
    %v140 = vadd.f32 %v136, %v138
    %v141 = vrot.slane %v140, 4
    %v142 = vadd.f32 %v140, %v141
    %v143 = vrot.slane %v142, 2
    %v144 = vadd.f32 %v142, %v143
    %v145 = vrot.slane %v144, 1
    %v146 = vadd.f32 %v144, %v145
    %v147 = vadd.f32 %v137, %v139
    %v148 = vrot.slane %v147, 4
    %v149 = vadd.f32 %v147, %v148
    %v150 = vrot.slane %v149, 2
    %v151 = vadd.f32 %v149, %v150
    %v152 = vrot.slane %v151, 1
    %v153 = vadd.f32 %v151, %v152
    %v154 = vrcp.pop 16.0
    %v155 = vmul.f32 %v146, %v154
    %v156 = vmul.f32 %v153, %v154
    %v157 = vsub.f32 %v136, %v155
    %v158 = vsub.f32 %v137, %v156
    %v159 = vsub.f32 %v138, %v155
    %v160 = vsub.f32 %v139, %v156
    %v161 = vmul.f32 %v157, %v157
    %v162 = vmul.f32 %v158, %v158
    %v163 = vmul.f32 %v159, %v159
    %v164 = vmul.f32 %v160, %v160
    %v165 = vadd.f32 %v161, %v163
    %v166 = vrot.slane %v165, 4
    %v167 = vadd.f32 %v165, %v166
    %v168 = vrot.slane %v167, 2
    %v169 = vadd.f32 %v167, %v168
    %v170 = vrot.slane %v169, 1
    %v171 = vadd.f32 %v169, %v170
    %v172 = vadd.f32 %v162, %v164
    %v173 = vrot.slane %v172, 4
    %v174 = vadd.f32 %v172, %v173
    %v175 = vrot.slane %v174, 2
    %v176 = vadd.f32 %v174, %v175
    %v177 = vrot.slane %v176, 1
    %v178 = vadd.f32 %v176, %v177
    %v179 = vmul.f32 %v171, %v154
    %v180 = vmul.f32 %v178, %v154
    %v181 = vadd.f32 %v179, 1e-05
    %v182 = vadd.f32 %v180, 1e-05
    %v183 = vrsqrt.pop %v181
    %v184 = vrsqrt.pop %v182
    %v185 = vmul.f32 %v157, %v183
    %v186 = vmul.f32 %v158, %v184
    %v187 = vmul.f32 %v159, %v183
    %v188 = vmul.f32 %v160, %v184
    %v189 = vld [vmem:[%s2] sm:$0xff]
    %v190 = vld [vmem:[%s2 + $0x8] sm:$0xff]
    %192 = vset.pattern.permute.xlu0 0
    %193 = vperm.xlu0 %192, %v189
    %v194 = vpop.permute.xlu0 %193
    %197 = vset.pattern.permute.xlu0 0
    %198 = vperm.xlu0 %197, %v190
    %v199 = vpop.permute.xlu0 %198
    %v201 = vmul.f32 %v185, %v194
    %v202 = vmul.f32 %v186, %v194
    %v203 = vmul.f32 %v187, %v199
    %v204 = vmul.f32 %v188, %v199
    %v205 = vld [vmem:[%s3] sm:$0xff]
    %v206 = vld [vmem:[%s3 + $0x8] sm:$0xff]
    %208 = vset.pattern.permute.xlu0 0
    %209 = vperm.xlu0 %208, %v205
    %v210 = vpop.permute.xlu0 %209
    %213 = vset.pattern.permute.xlu0 0
    %214 = vperm.xlu0 %213, %v206
    %v215 = vpop.permute.xlu0 %214
    %v217 = vadd.f32 %v201, %v210
    %v218 = vadd.f32 %v202, %v210
    %v219 = vadd.f32 %v203, %v215
    %v220 = vadd.f32 %v204, %v215
    %v221 = vmax.f32 %v217, 0.0
    %v222 = vmax.f32 %v218, 0.0
    %v223 = vmax.f32 %v219, 0.0
    %v224 = vmax.f32 %v220, 0.0
    %v225 = vld [vmem:[%s4] sm:$0xff]
    %v226 = vld [vmem:[%s4 + $0x8] sm:$0xff]
    %v227 = vld [vmem:[%s4 + $0x10] sm:$0xff]
    %v228 = vld [vmem:[%s4 + $0x18] sm:$0xff]
    %v229 = vld [vmem:[%s4 + $0x20] sm:$0xff]
    %v230 = vld [vmem:[%s4 + $0x28] sm:$0xff]
    %v231 = vld [vmem:[%s4 + $0x30] sm:$0xff]
    %v232 = vld [vmem:[%s4 + $0x38] sm:$0xff]
    %v233 = vld [vmem:[%s4 + $0x40] sm:$0xff]
    %v234 = vld [vmem:[%s4 + $0x48] sm:$0xff]
    %v235 = vld [vmem:[%s4 + $0x50] sm:$0xff]
    %v236 = vld [vmem:[%s4 + $0x58] sm:$0xff]
    %v237 = vld [vmem:[%s4 + $0x60] sm:$0xff]
    %v238 = vld [vmem:[%s4 + $0x68] sm:$0xff]
    %v239 = vld [vmem:[%s4 + $0x70] sm:$0xff]
    %v240 = vld [vmem:[%s4 + $0x78] sm:$0xff]
    %vm241 = vcmask 138240
    %v243 = vsel %vm241, %v225, 0
    %v246 = vsel %vm241, %v226, 0
    %v249 = vsel %vm241, %v227, 0
    %v252 = vsel %vm241, %v228, 0
    %v255 = vsel %vm241, %v229, 0
    %v258 = vsel %vm241, %v230, 0
    %v261 = vsel %vm241, %v231, 0
    %v264 = vsel %vm241, %v232, 0
    %v267 = vsel %vm241, %v233, 0
    %v270 = vsel %vm241, %v234, 0
    %v273 = vsel %vm241, %v235, 0
    %v276 = vsel %vm241, %v236, 0
    %v279 = vsel %vm241, %v237, 0
    %v282 = vsel %vm241, %v238, 0
    %v285 = vsel %vm241, %v239, 0
    %v288 = vsel %vm241, %v240, 0
    %vm290 = vcmask 1040384
    %v292 = vsel %vm290, 1.0, 0
    %294 = vmatprep.subr.mxu0 0.0
    %295 = vmatpush1.msra.mxu0 0.0
    %296 = vmatprep.subr.mxu0 0.0
    %297 = vmatpush1.msra.mxu0 0.0
    %298 = vmatprep.subr.mxu0 0.0
    %299 = vmatpush1.msra.mxu0 0.0
    %300 = vmatprep.subr.mxu0 0.0
    %301 = vmatpush1.msra.mxu0 0.0
    %302 = vmatprep.subr.mxu0 0.0
    %303 = vmatpush1.msra.mxu0 0.0
    %304 = vmatprep.subr.mxu0 0.0
    %305 = vmatpush1.msra.mxu0 0.0
    %306 = vmatprep.subr.mxu0 0.0
    %307 = vmatpush1.msra.mxu0 0.0
    %308 = vmatprep.subr.mxu0 0.0
    %309 = vmatpush1.msra.mxu0 0.0
    %310 = vmatprep.subr.mxu0 0.0
    %311 = vmatpush1.msra.mxu0 0.0
    %312 = vmatprep.subr.mxu0 0.0
    %313 = vmatpush1.msra.mxu0 0.0
    %314 = vmatprep.subr.mxu0 0.0
    %315 = vmatpush1.msra.mxu0 0.0
    %316 = vmatprep.subr.mxu0 0.0
    %317 = vmatpush1.msra.mxu0 0.0
    %318 = vmatprep.subr.mxu0 0.0
    %319 = vmatpush1.msra.mxu0 0.0
    %320 = vmatprep.subr.mxu0 %v292
    %321 = vmatpush1.msra.mxu0 %v292
    %322 = vmatprep.subr.mxu0 %v224
    %323 = vmatpush1.msra.mxu0 %v223
    %324 = vmatprep.subr.mxu0 %v222
    %325 = vmatpush1.msra.mxu0 %v221
    %326 = vmatprep.subr.mxu0 0.0
    %327 = vmatpush2.msra.mxu0 0.0
    %328 = vmatprep.subr.mxu0 0.0
    %329 = vmatpush2.msra.mxu0 0.0
    %330 = vmatprep.subr.mxu0 0.0
    %331 = vmatpush2.msra.mxu0 0.0
    %332 = vmatprep.subr.mxu0 0.0
    %333 = vmatpush2.msra.mxu0 0.0
    %334 = vmatprep.subr.mxu0 0.0
    %335 = vmatpush2.msra.mxu0 0.0
    %336 = vmatprep.subr.mxu0 0.0
    %337 = vmatpush2.msra.mxu0 0.0
    %338 = vmatprep.subr.mxu0 0.0
    %339 = vmatpush2.msra.mxu0 0.0
    %340 = vmatprep.subr.mxu0 0.0
    %341 = vmatpush2.msra.mxu0 0.0
    %342 = vmatprep.subr.mxu0 0.0
    %343 = vmatpush2.msra.mxu0 0.0
    %344 = vmatprep.subr.mxu0 0.0
    %345 = vmatpush2.msra.mxu0 0.0
    %346 = vmatprep.subr.mxu0 0.0
    %347 = vmatpush2.msra.mxu0 0.0
    %348 = vmatprep.subr.mxu0 0.0
    %349 = vmatpush2.msra.mxu0 0.0
    %350 = vmatprep.subr.mxu0 0.0
    %351 = vmatpush2.msra.mxu0 0.0
    %352 = vmatprep.subr.mxu0 0.0
    %353 = vmatpush2.msra.mxu0 0.0
    %354 = vmatprep.subr.mxu0 0.0
    %355 = vmatpush2.msra.mxu0 0.0
    %356 = vmatprep.subr.mxu0 0.0
    %357 = vmatpush2.msra.mxu0 0.0
    %358 = vmatprep.mubr.f32.mxu0 0.0
    %359 = vmatmul.mubr.f32.gmra.mxu0 %v243
    %v360 = vpop.f32.mrf.mxu0
    %v361 = vadd.f32 0.0, %v360
    %v362 = vpop.f32.mrf.mxu0
    %v363 = vadd.f32 0.0, %v362
    %364 = vmatprep.mubr.f32.mxu0 0.0
    %365 = vmatmul.mubr.f32.gmra.mxu0 %v246
    %v366 = vpop.f32.mrf.mxu0
    %v367 = vadd.f32 0.0, %v366
    %v368 = vpop.f32.mrf.mxu0
    %v369 = vadd.f32 0.0, %v368
    %370 = vmatprep.mubr.f32.mxu0 0.0
    %371 = vmatmul.mubr.f32.gmra.mxu0 %v249
    %v372 = vpop.f32.mrf.mxu0
    %v373 = vadd.f32 0.0, %v372
    %v374 = vpop.f32.mrf.mxu0
    %v375 = vadd.f32 0.0, %v374
    %376 = vmatprep.mubr.f32.mxu0 0.0
    %377 = vmatmul.mubr.f32.gmra.mxu0 %v252
    %v378 = vpop.f32.mrf.mxu0
    %v379 = vadd.f32 0.0, %v378
    %v380 = vpop.f32.mrf.mxu0
    %v381 = vadd.f32 0.0, %v380
    %382 = vmatprep.mubr.f32.mxu0 0.0
    %383 = vmatmul.mubr.f32.gmra.mxu0 %v255
    %v384 = vpop.f32.mrf.mxu0
    %v385 = vadd.f32 0.0, %v384
    %v386 = vpop.f32.mrf.mxu0
    %v387 = vadd.f32 0.0, %v386
    %388 = vmatprep.mubr.f32.mxu0 0.0
    %389 = vmatmul.mubr.f32.gmra.mxu0 %v258
    %v390 = vpop.f32.mrf.mxu0
    %v391 = vadd.f32 0.0, %v390
    %v392 = vpop.f32.mrf.mxu0
    %v393 = vadd.f32 0.0, %v392
    %394 = vmatprep.mubr.f32.mxu0 0.0
    %395 = vmatmul.mubr.f32.gmra.mxu0 %v261
    %v396 = vpop.f32.mrf.mxu0
    %v397 = vadd.f32 0.0, %v396
    %v398 = vpop.f32.mrf.mxu0
    %v399 = vadd.f32 0.0, %v398
    %400 = vmatprep.mubr.f32.mxu0 0.0
    %401 = vmatmul.mubr.f32.gmra.mxu0 %v264
    %v402 = vpop.f32.mrf.mxu0
    %v403 = vadd.f32 0.0, %v402
    %v404 = vpop.f32.mrf.mxu0
    %v405 = vadd.f32 0.0, %v404
    %406 = vmatprep.mubr.f32.mxu0 0.0
    %407 = vmatmul.mubr.f32.gmra.mxu0 %v267
    %v408 = vpop.f32.mrf.mxu0
    %v409 = vadd.f32 0.0, %v408
    %v410 = vpop.f32.mrf.mxu0
    %v411 = vadd.f32 0.0, %v410
    %412 = vmatprep.mubr.f32.mxu0 0.0
    %413 = vmatmul.mubr.f32.gmra.mxu0 %v270
    %v414 = vpop.f32.mrf.mxu0
    %v415 = vadd.f32 0.0, %v414
    %v416 = vpop.f32.mrf.mxu0
    %v417 = vadd.f32 0.0, %v416
    %418 = vmatprep.mubr.f32.mxu0 0.0
    %419 = vmatmul.mubr.f32.gmra.mxu0 %v273
    %v420 = vpop.f32.mrf.mxu0
    %v421 = vadd.f32 0.0, %v420
    %v422 = vpop.f32.mrf.mxu0
    %v423 = vadd.f32 0.0, %v422
    %424 = vmatprep.mubr.f32.mxu0 0.0
    %425 = vmatmul.mubr.f32.gmra.mxu0 %v276
    %v426 = vpop.f32.mrf.mxu0
    %v427 = vadd.f32 0.0, %v426
    %v428 = vpop.f32.mrf.mxu0
    %v429 = vadd.f32 0.0, %v428
    %430 = vmatprep.mubr.f32.mxu0 0.0
    %431 = vmatmul.mubr.f32.gmra.mxu0 %v279
    %v432 = vpop.f32.mrf.mxu0
    %v433 = vadd.f32 0.0, %v432
    %v434 = vpop.f32.mrf.mxu0
    %v435 = vadd.f32 0.0, %v434
    %436 = vmatprep.mubr.f32.mxu0 0.0
    %437 = vmatmul.mubr.f32.gmra.mxu0 %v282
    %v438 = vpop.f32.mrf.mxu0
    %v439 = vadd.f32 0.0, %v438
    %v440 = vpop.f32.mrf.mxu0
    %v441 = vadd.f32 0.0, %v440
    %442 = vmatprep.mubr.f32.mxu0 0.0
    %443 = vmatmul.mubr.f32.gmra.mxu0 %v285
    %v444 = vpop.f32.mrf.mxu0
    %v445 = vadd.f32 0.0, %v444
    %v446 = vpop.f32.mrf.mxu0
    %v447 = vadd.f32 0.0, %v446
    %448 = vmatprep.mubr.f32.mxu0 0.0
    %449 = vmatmul.mubr.f32.gmra.mxu0 %v288
    %v450 = vpop.f32.mrf.mxu0
    %v451 = vadd.f32 0.0, %v450
    %v452 = vpop.f32.mrf.mxu0
    %v453 = vadd.f32 0.0, %v452
    %454 = vdwg.mxu0
    %v455 = vmax.f32 %v361, 0.0
    %v456 = vmax.f32 %v363, 0.0
    %v457 = vmax.f32 %v367, 0.0
    %v458 = vmax.f32 %v369, 0.0
    %v459 = vmax.f32 %v373, 0.0
    %v460 = vmax.f32 %v375, 0.0
    %v461 = vmax.f32 %v379, 0.0
    %v462 = vmax.f32 %v381, 0.0
    %v463 = vmax.f32 %v385, 0.0
    %v464 = vmax.f32 %v387, 0.0
    %v465 = vmax.f32 %v391, 0.0
    %v466 = vmax.f32 %v393, 0.0
    %v467 = vmax.f32 %v397, 0.0
    %v468 = vmax.f32 %v399, 0.0
    %v469 = vmax.f32 %v403, 0.0
    %v470 = vmax.f32 %v405, 0.0
    %v471 = vmax.f32 %v409, 0.0
    %v472 = vmax.f32 %v411, 0.0
    %v473 = vmax.f32 %v415, 0.0
    %v474 = vmax.f32 %v417, 0.0
    %v475 = vmax.f32 %v421, 0.0
    %v476 = vmax.f32 %v423, 0.0
    %v477 = vmax.f32 %v427, 0.0
    %v478 = vmax.f32 %v429, 0.0
    %v479 = vmax.f32 %v433, 0.0
    %v480 = vmax.f32 %v435, 0.0
    %v481 = vmax.f32 %v439, 0.0
    %v482 = vmax.f32 %v441, 0.0
    %v483 = vmax.f32 %v445, 0.0
    %v484 = vmax.f32 %v447, 0.0
    %v485 = vmax.f32 %v451, 0.0
    %v486 = vmax.f32 %v453, 0.0
    %v487 = vld [vmem:[%s5] sm:$0x1]
    %vm488 = vcmp.gt.f32.partialorder %v39, 0.0
    %vm489 = vcmp.gt.f32.partialorder %v45, 0.0
    %v490 = vld [vmem:[#allocation2] sm:$0x1]
    %492 = vset.pattern.permute.xlu0 0
    %493 = vperm.xlu0 %492, %v490
    %v494 = vpop.permute.xlu0 %493
    %v496 = vlaneseq
    %v497 = vshrl.u32 %v496, 7
    %v498 = vsub.s32 0, %v497
    %v499 = vrot.slane %v494, %v498
    %500 = vmatprep.subr.mxu0 %v486
    %501 = vmatpush1.msra.mxu0 %v485
    %502 = vmatprep.subr.mxu0 %v484
    %503 = vmatpush1.msra.mxu0 %v483
    %504 = vmatprep.subr.mxu0 %v482
    %505 = vmatpush1.msra.mxu0 %v481
    %506 = vmatprep.subr.mxu0 %v480
    %507 = vmatpush1.msra.mxu0 %v479
    %508 = vmatprep.subr.mxu0 %v478
    %509 = vmatpush1.msra.mxu0 %v477
    %510 = vmatprep.subr.mxu0 %v476
    %511 = vmatpush1.msra.mxu0 %v475
    %512 = vmatprep.subr.mxu0 %v474
    %513 = vmatpush1.msra.mxu0 %v473
    %514 = vmatprep.subr.mxu0 %v472
    %515 = vmatpush1.msra.mxu0 %v471
    %516 = vmatprep.subr.mxu0 %v470
    %517 = vmatpush1.msra.mxu0 %v469
    %518 = vmatprep.subr.mxu0 %v468
    %519 = vmatpush1.msra.mxu0 %v467
    %520 = vmatprep.subr.mxu0 %v466
    %521 = vmatpush1.msra.mxu0 %v465
    %522 = vmatprep.subr.mxu0 %v464
    %523 = vmatpush1.msra.mxu0 %v463
    %524 = vmatprep.subr.mxu0 %v462
    %525 = vmatpush1.msra.mxu0 %v461
    %526 = vmatprep.subr.mxu0 %v460
    %527 = vmatpush1.msra.mxu0 %v459
    %528 = vmatprep.subr.mxu0 %v458
    %529 = vmatpush1.msra.mxu0 %v457
    %530 = vmatprep.subr.mxu0 %v456
    %531 = vmatpush1.msra.mxu0 %v455
    %532 = vmatprep.subr.mxu0 0.0
    %533 = vmatpush2.msra.mxu0 0.0
    %534 = vmatprep.subr.mxu0 0.0
    %535 = vmatpush2.msra.mxu0 0.0
    %536 = vmatprep.subr.mxu0 0.0
    %537 = vmatpush2.msra.mxu0 0.0
    %538 = vmatprep.subr.mxu0 0.0
    %539 = vmatpush2.msra.mxu0 0.0
    %540 = vmatprep.subr.mxu0 0.0
    %541 = vmatpush2.msra.mxu0 0.0
    %542 = vmatprep.subr.mxu0 0.0
    %543 = vmatpush2.msra.mxu0 0.0
    %544 = vmatprep.subr.mxu0 0.0
    %545 = vmatpush2.msra.mxu0 0.0
    %546 = vmatprep.subr.mxu0 0.0
    %547 = vmatpush2.msra.mxu0 0.0
    %548 = vmatprep.subr.mxu0 0.0
    %549 = vmatpush2.msra.mxu0 0.0
    %550 = vmatprep.subr.mxu0 0.0
    %551 = vmatpush2.msra.mxu0 0.0
    %552 = vmatprep.subr.mxu0 0.0
    %553 = vmatpush2.msra.mxu0 0.0
    %554 = vmatprep.subr.mxu0 0.0
    %555 = vmatpush2.msra.mxu0 0.0
    %556 = vmatprep.subr.mxu0 0.0
    %557 = vmatpush2.msra.mxu0 0.0
    %558 = vmatprep.subr.mxu0 0.0
    %559 = vmatpush2.msra.mxu0 0.0
    %560 = vmatprep.subr.mxu0 0.0
    %561 = vmatpush2.msra.mxu0 0.0
    %562 = vmatprep.subr.mxu0 0.0
    %563 = vmatpush2.msra.mxu0 0.0
    %564 = vmatprep.mubr.f32.mxu0 0.0
    %565 = vmatmul.mubr.f32.gmra.mxu0 %v487
    %v566 = vpop.f32.mrf.mxu0
    %v567 = vadd.f32 %v499, %v566
    %v568 = vpop.f32.mrf.mxu0
    %v569 = vadd.f32 %v499, %v568
    %570 = vdwg.mxu0
    %v571 = vsel %vm488, %v567, 0.0
    %v572 = vsel %vm489, %v569, 0.0
    %v573 = vld [vmem:[%s7] sm:$0x3]
    %v575 = vlaneseq
    %v576 = vshrl.u32 %v575, 7
    %v577 = vsub.s32 0, %v576
    %v578 = vrot.slane %v573, %v577
    %v579 = vlaneseq
    %v580 = vshrl.u32 %v579, 7
    %v581 = vsub.s32 1, %v580
    %v582 = vrot.slane %v573, %v581
    %v585 = vadd.f32 %v571, %v578
    %v586 = vadd.f32 %v572, %v582
    %v589 = vcombine.low %v585, %v586
    %v591 = vunpack.c.l.s4 1966171168
    %v592 = vunpack.c.0.s8 %v591
    %v593 = vlaneseq
    %v594 = vshrl.u32 %v593, 7
    %v595 = vsub.s32 %v592, %v594
    %v596 = vrot.slane %v589, %v595
    %v598 = vunpack.c.l.s4 1966171168
    %v599 = vunpack.c.0.s8 %v598
    %v600 = vlaneseq
    %v601 = vshrl.u32 %v600, 7
    %v602 = vsub.s32 %v599, %v601
    %v603 = vrot.slane %v596, %v602
    %v605 = vlaneseq
    %vm606 = vcmp.ge.s32.totalorder %v605, 0
    %vm607 = vcmp.lt.s32.totalorder %v605, 256
    %vm608 = vmand %vm606, %vm607
    %609 = vst.msk [vmem:[#allocation3] sm:$0x3] %vm608, %v603
    // Predicated region
    $region34: #{tpu_custom_call.1} parent=1 // pred_check
      _
    $region35: #{tpu_custom_call.1} parent=1 // pred_check_branch
      %611 = sbr.rel (0) target = $region37
    $region36: #{tpu_custom_call.1} parent=1 // pred_region
      %s613 = ssub.s32 32, 32
      %614 = vsyncadd [#allocation4], %s613
      %s616 = sshll.u32 [#allocation3], 4
      %s617 = int_to_ptr.vmem [resolvable:$true] %s616
      %619 = dma.vmem_to_hbm [thread:$0]  %s617, 32, %s8, [#allocation4]
    $region37: #{tpu_custom_call.1} parent=1 // pred_fallthru
      _
    // Predicated region
    $region38: #{tpu_custom_call.1} parent=1 // pred_check
      _
    $region39: #{tpu_custom_call.1} parent=1 // pred_check_branch
      %621 = sbr.rel (0) target = $region41
    $region40: #{tpu_custom_call.1} parent=1 // pred_region
      %622 = dma.done [#allocation4], 32
    $region41: #{tpu_custom_call.1} parent=1 // pred_fallthru
      _
    %623 = vsyncpa [#allocation4], 1

</llo_original>
